<compile_context>
chip_gen: v7x
topology: tpu7x:2x2x1
jax: 0.10.0
libtpu: 0.0.40
codegen_flags: <defaults>
</compile_context>

<pallas_src>
import functools

import jax
import jax.numpy as jnp
from jax import lax
from jax.experimental import pallas as pl
from jax.experimental.pallas import tpu as pltpu

_LANE = 128
_SUBLANE = 8
_NT = (((1,), (1,)), ((), ()))  # contract last dims of both operands: a @ b.T


def _round_up(n, m):
    return ((n + m - 1) // m) * m


@functools.lru_cache(maxsize=None)
def _two_tensorcores() -> bool:
    """True on chips with 2 TensorCores per chip (v7x-class)."""
    try:
        kind = jax.devices()[0].device_kind.lower()
    except Exception:
        return False
    return ("v7" in kind) or ("7x" in kind)


def _padded_tile_bytes(rows, cols, itemsize):
    """VMEM footprint of a (rows, cols) tile after (8, 128) layout padding."""
    return _round_up(max(rows, 1), _SUBLANE) * _round_up(max(cols, 1), _LANE) * itemsize


def _cap_bb_for_vmem(bb, input_size, hidden, budget_bytes=16 << 20):
    """Cap the batch tile so the per-step working set (f32 intermediates + act tiles)
    stays within a conservative VMEM budget (matters for large hidden)."""
    while bb > _LANE:
        work = (3 * _padded_tile_bytes(bb, hidden, 4)          # h1, h2 + temporaries
                + 4 * _padded_tile_bytes(bb, input_size, 4))   # x / out, double-buffered
        if work <= budget_bytes:
            break
        bb = max(_LANE, (bb // 2) // _LANE * _LANE)
    return bb


def _vmem_estimate_bytes(bb, input_size, hidden):
    est = 0
    est += 2 * 2 * _padded_tile_bytes(bb, input_size, 4)        # x + out tiles, 2 buffers each
    est += 2 * (_padded_tile_bytes(hidden, input_size, 2)       # bf16 weights (2 buffers each)
                + _padded_tile_bytes(hidden, hidden, 2)
                + _padded_tile_bytes(input_size, hidden, 2))
    est += 2 * (2 * _padded_tile_bytes(1, hidden, 4)
                + _padded_tile_bytes(1, input_size, 4))         # biases
    est += 3 * _padded_tile_bytes(bb, hidden, 4)                # f32 intermediates
    return est


def _choose_bb(B, block_batch, input_size, hidden, two_tc):
    """Static (trace-time) batch-tile selection."""
    if block_batch is None:
        # Single TC (v5e/v6e): one big tile amortizes the ~600-cycle per-step overhead.
        # Dual TC (v7x): smaller default so >=2 parallel steps exist for big batches.
        block_batch = 1024 if two_tc else 4096
    block_batch = max(_LANE, _round_up(block_batch, _LANE))
    block_batch = _cap_bb_for_vmem(block_batch, input_size, hidden)
    if B <= block_batch:
        if two_tc and B >= 1024:
            # Two lane-aligned tiles (each >= 512 lanes) so both TensorCores get work
            # without falling off the tile-size roofline cliff.
            return max(512, _round_up(-(-B // 2), _LANE))
        # Single full-extent block: no padding at all, no (8,128) divisibility concerns.
        return B
    return block_batch


def _mlp_kernel(x_ref, w1_ref, b1_ref, w2_ref, b2_ref, w3_ref, b3_ref, o_ref):
    # x_ref: (bb, in) natural layout; cast to bf16 in-kernel (VPU, free slot).
    x_bf = x_ref[...].astype(jnp.bfloat16)
    # h1 = tanh(x @ W1^T + b1)                                   (bb, hid) f32
    h1 = jnp.tanh(
        lax.dot_general(x_bf, w1_ref[...], _NT, preferred_element_type=jnp.float32)
        + b1_ref[...])
    # h2 = tanh(h1 @ W2^T + b2)                                  (bb, hid) f32
    h2 = jnp.tanh(
        lax.dot_general(h1.astype(jnp.bfloat16), w2_ref[...], _NT,
                        preferred_element_type=jnp.float32)
        + b2_ref[...])
    # out = h2 @ W3^T + b3                                       (bb, in)  -> natural store
    o_ref[...] = (
        lax.dot_general(h2.astype(jnp.bfloat16), w3_ref[...], _NT,
                        preferred_element_type=jnp.float32)
        + b3_ref[...]).astype(o_ref.dtype)


def _dense_forward(x, w1, b1, w2, b2, w3, b3):
    """Plain-XLA fast path (exact f32 math) for tiny batches."""
    x = x.astype(jnp.float32)
    h1 = jnp.tanh(x @ w1.T + b1)
    h2 = jnp.tanh(h1 @ w2.T + b2)
    return h2 @ w3.T + b3


@functools.partial(
    jax.jit,
    static_argnames=("block_batch", "force_pallas", "min_pallas_batch", "out_dtype"))
def embedding_network_forward(x, w1, b1, w2, b2, w3, b3, *, block_batch=None,
                              force_pallas=False, min_pallas_batch=256,
                              out_dtype=jnp.float32):
    """Pallas forward for EmbeddingNetwork (target_net=True).

    x : (B, input_size)          any dtype (module applies .float())
    w1: (hidden, input_size)     b1: (hidden,)       # PyTorch nn.Linear layout
    w2: (hidden, hidden)         b2: (hidden,)
    w3: (input_size, hidden)     b3: (input_size,)
    returns (B, input_size) float32 (or `out_dtype`)
    """
    B, input_size = x.shape
    hidden = w1.shape[0]

    if not jnp.issubdtype(x.dtype, jnp.floating):
        x = x.astype(jnp.float32)

    # Small-batch fast path: three tiny matmuls fuse cheaper in XLA than a pallas launch.
    if (not force_pallas) and B < min_pallas_batch:
        return _dense_forward(x, w1, b1, w2, b2, w3, b3).astype(out_dtype)

    two_tc = _two_tensorcores()
    bb = _choose_bb(B, block_batch, input_size, hidden, two_tc)
    grid = (pl.cdiv(B, bb),)

    # Parameters: bf16 MXU operands (tiny, grid-invariant), f32 row-vector biases.
    w1b = w1.astype(jnp.bfloat16)
    w2b = w2.astype(jnp.bfloat16)
    w3b = w3.astype(jnp.bfloat16)
    b1r = b1.astype(jnp.float32).reshape(1, hidden)
    b2r = b2.astype(jnp.float32).reshape(1, hidden)
    b3r = b3.astype(jnp.float32).reshape(1, input_size)

    # Explicit VMEM budgeting (keeps us inside v7x's 64 MiB / the 16-32 MiB scoped defaults).
    est = _vmem_estimate_bytes(bb, input_size, hidden)
    vmem_limit = int(min(64 << 20, max(32 << 20, int(1.5 * est) + (4 << 20))))

    inv = lambda r, c: pl.BlockSpec((r, c), lambda i: (0, 0))   # grid-invariant operand

    out = pl.pallas_call(
        _mlp_kernel,
        out_shape=jax.ShapeDtypeStruct((B, input_size), out_dtype),
        grid_spec=pltpu.PrefetchScalarGridSpec(
            num_scalar_prefetch=0,
            grid=grid,
            in_specs=[
                pl.BlockSpec((bb, input_size), lambda i: (i, 0)),  # x tile (natural layout)
                inv(hidden, input_size),   # w1
                inv(1, hidden),            # b1
                inv(hidden, hidden),       # w2
                inv(1, hidden),            # b2
                inv(input_size, hidden),   # w3
                inv(1, input_size),        # b3
            ],
            out_specs=pl.BlockSpec((bb, input_size), lambda i: (i, 0)),
        ),
        compiler_params=pltpu.CompilerParams(
            dimension_semantics=("parallel",),
            vmem_limit_bytes=vmem_limit,
        ),
    )(x, w1b, b1r, w2b, b2r, w3b, b3r)
    return out


def init_params(key, input_size, hidden_size):
    """Deterministic init mimicking nn.Linear default (uniform +-1/sqrt(fan_in)),
    stored in PyTorch layout: W (out_features, in_features), b (out_features,)."""
    ks = jax.random.split(key, 6)

    def lin(kw, kb, fan_in, fan_out):
        bound = 1.0 / jnp.sqrt(fan_in)
        w = jax.random.uniform(kw, (fan_out, fan_in), jnp.float32, -bound, bound)
        b = jax.random.uniform(kb, (fan_out,), jnp.float32, -bound, bound)
        return w, b

    w1, b1 = lin(ks[0], ks[1], input_size, hidden_size)
    w2, b2 = lin(ks[2], ks[3], hidden_size, hidden_size)
    w3, b3 = lin(ks[4], ks[5], hidden_size, input_size)
    return w1, b1, w2, b2, w3, b3


if __name__ == "__main__":
    key = jax.random.PRNGKey(0)
    k1, k2, kp = jax.random.split(key, 3)

    input_size, hidden_size = 16, 32
    params = init_params(kp, input_size, hidden_size)
    w1, b1, w2, b2, w3, b3 = params

    def ref_bf16(x):
        # Same bf16-operand / f32-accumulate math as the kernel.
        xb = x.astype(jnp.bfloat16)
        h1 = jnp.tanh(jnp.dot(xb, w1.astype(jnp.bfloat16).T,
                              preferred_element_type=jnp.float32) + b1)
        h2 = jnp.tanh(jnp.dot(h1.astype(jnp.bfloat16), w2.astype(jnp.bfloat16).T,
                              preferred_element_type=jnp.float32) + b2)
        return jnp.dot(h2.astype(jnp.bfloat16), w3.astype(jnp.bfloat16).T,
                       preferred_element_type=jnp.float32) + b3

    def ref_f32(x):
        h1 = jnp.tanh(x @ w1.T + b1)
        h2 = jnp.tanh(h1 @ w2.T + b2)
        return h2 @ w3.T + b3

    cases = [
        (jax.random.normal(k1, (8, input_size), jnp.float32), {}),        # tiny batch, 1 full block
        (jax.random.normal(k2, (300, input_size), jnp.float32), {}),      # ragged batch, 1 full block
        (jax.random.normal(k2, (300, input_size), jnp.float32),
         {"block_batch": 128}),                                           # multi-step grid + partial last block
    ]
    for x, kw in cases:
        out = jax.block_until_ready(
            embedding_network_forward(x, *params, force_pallas=True, **kw))
        assert out.shape == x.shape
        assert out.dtype == jnp.float32
        r = ref_bf16(x)
        assert jnp.allclose(out, r, atol=2e-3, rtol=2e-3), float(jnp.max(jnp.abs(out - r)))
        # Loose sanity check vs pure-f32 PyTorch math (bf16 operand rounding only).
        assert jnp.allclose(out, ref_f32(x), atol=5e-2, rtol=5e-2)

    # Small-batch auto path (skips Pallas entirely): exact f32 math.
    x_small = jax.random.normal(k1, (8, input_size), jnp.float32)
    out_fast = jax.block_until_ready(embedding_network_forward(x_small, *params))
    assert jnp.allclose(out_fast, ref_f32(x_small), atol=1e-5, rtol=1e-5)

    print("KERNEL_OK")
</pallas_src>

<mosaic_0001>
module attributes {stable_mosaic.version = 11 : i64} {
  func.func @_mlp_kernel(%arg0: i32, %arg1: memref<8x16xf32, #tpu.memory_space<vmem>>, %arg2: memref<32x16xbf16, #tpu.memory_space<vmem>>, %arg3: memref<1x32xf32, #tpu.memory_space<vmem>>, %arg4: memref<32x32xbf16, #tpu.memory_space<vmem>>, %arg5: memref<1x32xf32, #tpu.memory_space<vmem>>, %arg6: memref<16x32xbf16, #tpu.memory_space<vmem>>, %arg7: memref<1x16xf32, #tpu.memory_space<vmem>>, %arg8: memref<8x16xf32, #tpu.memory_space<vmem>>) attributes {dimension_semantics = [#tpu.dimension_semantics<parallel>], iteration_bounds = array<i64: 1>, scalar_prefetch = 0 : i64, scratch_operands = 0 : i64, tpu.core_type = #tpu.core_type<tc>, window_params = [{transform_indices = @transform_0, window_bounds = array<i64: 8, 16>}, {pipeline_mode = #tpu.pipeline_mode<synchronous>, transform_indices = @transform_1, window_bounds = array<i64: 32, 16>}, {pipeline_mode = #tpu.pipeline_mode<synchronous>, transform_indices = @transform_2, window_bounds = array<i64: 1, 32>}, {pipeline_mode = #tpu.pipeline_mode<synchronous>, transform_indices = @transform_3, window_bounds = array<i64: 32, 32>}, {pipeline_mode = #tpu.pipeline_mode<synchronous>, transform_indices = @transform_4, window_bounds = array<i64: 1, 32>}, {pipeline_mode = #tpu.pipeline_mode<synchronous>, transform_indices = @transform_5, window_bounds = array<i64: 16, 32>}, {pipeline_mode = #tpu.pipeline_mode<synchronous>, transform_indices = @transform_6, window_bounds = array<i64: 1, 16>}, {transform_indices = @transform_7, window_bounds = array<i64: 8, 16>}]} {
    %c0 = arith.constant 0 : index
    %c0_0 = arith.constant 0 : index
    %0 = vector.load %arg1[%c0, %c0_0] : memref<8x16xf32, #tpu.memory_space<vmem>>, vector<8x16xf32>
    %1 = arith.truncf %0 : vector<8x16xf32> to vector<8x16xbf16>
    %c0_1 = arith.constant 0 : index
    %c0_2 = arith.constant 0 : index
    %2 = vector.load %arg2[%c0_1, %c0_2] : memref<32x16xbf16, #tpu.memory_space<vmem>>, vector<32x16xbf16>
    %cst = arith.constant dense<0.000000e+00> : vector<8x32xf32>
    %3 = tpu.matmul %1, %2, %cst {dimension_numbers = #tpu.dot_dimension_numbers<[1], [1], [0], [0], [0, 0, 1, 0], [], []>} : vector<8x16xbf16>, vector<32x16xbf16>, vector<8x32xf32> -> vector<8x32xf32>
    %c0_3 = arith.constant 0 : index
    %c0_4 = arith.constant 0 : index
    %4 = vector.load %arg3[%c0_3, %c0_4] : memref<1x32xf32, #tpu.memory_space<vmem>>, vector<1x32xf32>
    %5 = vector.broadcast %4 : vector<1x32xf32> to vector<8x32xf32>
    %6 = arith.addf %3, %5 : vector<8x32xf32>
    %7 = math.tanh %6 : vector<8x32xf32>
    %8 = arith.truncf %7 : vector<8x32xf32> to vector<8x32xbf16>
    %c0_5 = arith.constant 0 : index
    %c0_6 = arith.constant 0 : index
    %9 = vector.load %arg4[%c0_5, %c0_6] : memref<32x32xbf16, #tpu.memory_space<vmem>>, vector<32x32xbf16>
    %cst_7 = arith.constant dense<0.000000e+00> : vector<8x32xf32>
    %10 = tpu.matmul %8, %9, %cst_7 {dimension_numbers = #tpu.dot_dimension_numbers<[1], [1], [0], [0], [0, 0, 1, 0], [], []>} : vector<8x32xbf16>, vector<32x32xbf16>, vector<8x32xf32> -> vector<8x32xf32>
    %c0_8 = arith.constant 0 : index
    %c0_9 = arith.constant 0 : index
    %11 = vector.load %arg5[%c0_8, %c0_9] : memref<1x32xf32, #tpu.memory_space<vmem>>, vector<1x32xf32>
    %12 = vector.broadcast %11 : vector<1x32xf32> to vector<8x32xf32>
    %13 = arith.addf %10, %12 : vector<8x32xf32>
    %14 = math.tanh %13 : vector<8x32xf32>
    %15 = arith.truncf %14 : vector<8x32xf32> to vector<8x32xbf16>
    %c0_10 = arith.constant 0 : index
    %c0_11 = arith.constant 0 : index
    %16 = vector.load %arg6[%c0_10, %c0_11] : memref<16x32xbf16, #tpu.memory_space<vmem>>, vector<16x32xbf16>
    %cst_12 = arith.constant dense<0.000000e+00> : vector<8x16xf32>
    %17 = tpu.matmul %15, %16, %cst_12 {dimension_numbers = #tpu.dot_dimension_numbers<[1], [1], [0], [0], [0, 0, 1, 0], [], []>} : vector<8x32xbf16>, vector<16x32xbf16>, vector<8x16xf32> -> vector<8x16xf32>
    %c0_13 = arith.constant 0 : index
    %c0_14 = arith.constant 0 : index
    %18 = vector.load %arg7[%c0_13, %c0_14] : memref<1x16xf32, #tpu.memory_space<vmem>>, vector<1x16xf32>
    %19 = vector.broadcast %18 : vector<1x16xf32> to vector<8x16xf32>
    %20 = arith.addf %17, %19 : vector<8x16xf32>
    %c0_15 = arith.constant 0 : index
    %c0_16 = arith.constant 0 : index
    %21 = vector.load %arg8[%c0_15, %c0_16] : memref<8x16xf32, #tpu.memory_space<vmem>>, vector<8x16xf32>
    tpu.vector_store %arg8[%c0_15, %c0_16], %20 {strides = array<i32>} : memref<8x16xf32, #tpu.memory_space<vmem>>, vector<8x16xf32>,
    return
  }
  func.func @transform_0(%arg0: i32) -> (i32, i32) {
    %c0_i32 = arith.constant 0 : i32
    %c0_i32_0 = arith.constant 0 : i32
    return %arg0, %c0_i32 : i32, i32
  }
  func.func @transform_1(%arg0: i32) -> (i32, i32) {
    %c0_i32 = arith.constant 0 : i32
    %c0_i32_0 = arith.constant 0 : i32
    %c0_i32_1 = arith.constant 0 : i32
    return %c0_i32, %c0_i32_0 : i32, i32
  }
  func.func @transform_2(%arg0: i32) -> (i32, i32) {
    %c0_i32 = arith.constant 0 : i32
    %c0_i32_0 = arith.constant 0 : i32
    %c0_i32_1 = arith.constant 0 : i32
    return %c0_i32, %c0_i32_0 : i32, i32
  }
  func.func @transform_3(%arg0: i32) -> (i32, i32) {
    %c0_i32 = arith.constant 0 : i32
    %c0_i32_0 = arith.constant 0 : i32
    %c0_i32_1 = arith.constant 0 : i32
    return %c0_i32, %c0_i32_0 : i32, i32
  }
  func.func @transform_4(%arg0: i32) -> (i32, i32) {
    %c0_i32 = arith.constant 0 : i32
    %c0_i32_0 = arith.constant 0 : i32
    %c0_i32_1 = arith.constant 0 : i32
    return %c0_i32, %c0_i32_0 : i32, i32
  }
  func.func @transform_5(%arg0: i32) -> (i32, i32) {
    %c0_i32 = arith.constant 0 : i32
    %c0_i32_0 = arith.constant 0 : i32
    %c0_i32_1 = arith.constant 0 : i32
    return %c0_i32, %c0_i32_0 : i32, i32
  }
  func.func @transform_6(%arg0: i32) -> (i32, i32) {
    %c0_i32 = arith.constant 0 : i32
    %c0_i32_0 = arith.constant 0 : i32
    %c0_i32_1 = arith.constant 0 : i32
    return %c0_i32, %c0_i32_0 : i32, i32
  }
  func.func @transform_7(%arg0: i32) -> (i32, i32) {
    %c0_i32 = arith.constant 0 : i32
    %c0_i32_0 = arith.constant 0 : i32
    return %arg0, %c0_i32 : i32, i32
  }
}

</mosaic_0001>

<llo_original>
// kernel: embedding_network_forward.1
$region0: #{embedding_network_forward.1}
  #allocation0 [shape = 'u32[]', space=smem, size = 0x4, offset = 0x4, fixed_abs, tag = 'smem constant byte address 0x4 - core index']
  #allocation1 [shape = 'u32[144,128]{1,0:T(1,128)}', space=vmem, size = 0x12000, scoped, tag = 'internal scratch']
  %s0 = inlined_call_operand.vmem [shape: f32[8,16], index: 0, kind: input, shape index: {}]
  %s1 = inlined_call_operand.vmem [shape: bf16[32,16], index: 1, kind: input, shape index: {}]
  %s2 = inlined_call_operand.vmem [shape: f32[1,32], index: 2, kind: input, shape index: {}]
  %s3 = inlined_call_operand.vmem [shape: bf16[32,32], index: 3, kind: input, shape index: {}]
  %s4 = inlined_call_operand.vmem [shape: f32[1,32], index: 4, kind: input, shape index: {}]
  %s5 = inlined_call_operand.vmem [shape: bf16[16,32], index: 5, kind: input, shape index: {}]
  %s6 = inlined_call_operand.vmem [shape: f32[1,16], index: 6, kind: input, shape index: {}]
  %s7 = inlined_call_operand.hbm [shape: f32[8,16], index: 7, kind: output, shape index: {}]
  %s8 = sld [smem:[#allocation0]]
  $region38: #{embedding_network_forward.1} parent=0
    _
  %s10 = ssub.s32 1, %s8
  %s11 = scalar_select 0, %s10, %s8
  $region1: #{embedding_network_forward.1} parent=0
    #allocation2 [shape = 'u8[4096]{0}', space=vmem, size = 0x1000, scoped, tag = 'output window, operand 0, single buffered']
    #allocation3 [shape = 's32[1]{0}', space=sflag, size = 0x4, scoped, tag = 'scoped memory for embedding_network_forward.1']
    %12 = vsyncpa [#allocation3], 0
    // Predicated region
    $region2: #{embedding_network_forward.1} parent=1 // pred_check
      _
    $region3: #{embedding_network_forward.1} parent=1 // pred_check_branch
      %14 = sbr.rel (0) target = $region5
    $region4: #{embedding_network_forward.1} parent=1 // pred_region
      _
    $region5: #{embedding_network_forward.1} parent=1 // pred_fallthru
      _
    // Predicated region
    $region6: #{embedding_network_forward.1} parent=1 // pred_check
      _
    $region7: #{embedding_network_forward.1} parent=1 // pred_check_branch
      %16 = sbr.rel (0) target = $region9
    $region8: #{embedding_network_forward.1} parent=1 // pred_region
      _
    $region9: #{embedding_network_forward.1} parent=1 // pred_fallthru
      _
    // Predicated region
    $region10: #{embedding_network_forward.1} parent=1 // pred_check
      _
    $region11: #{embedding_network_forward.1} parent=1 // pred_check_branch
      %18 = sbr.rel (0) target = $region13
    $region12: #{embedding_network_forward.1} parent=1 // pred_region
      _
    $region13: #{embedding_network_forward.1} parent=1 // pred_fallthru
      _
    // Predicated region
    $region14: #{embedding_network_forward.1} parent=1 // pred_check
      _
    $region15: #{embedding_network_forward.1} parent=1 // pred_check_branch
      %20 = sbr.rel (0) target = $region17
    $region16: #{embedding_network_forward.1} parent=1 // pred_region
      _
    $region17: #{embedding_network_forward.1} parent=1 // pred_fallthru
      _
    // Predicated region
    $region18: #{embedding_network_forward.1} parent=1 // pred_check
      _
    $region19: #{embedding_network_forward.1} parent=1 // pred_check_branch
      %22 = sbr.rel (0) target = $region21
    $region20: #{embedding_network_forward.1} parent=1 // pred_region
      _
    $region21: #{embedding_network_forward.1} parent=1 // pred_fallthru
      _
    // Predicated region
    $region22: #{embedding_network_forward.1} parent=1 // pred_check
      _
    $region23: #{embedding_network_forward.1} parent=1 // pred_check_branch
      %24 = sbr.rel (0) target = $region25
    $region24: #{embedding_network_forward.1} parent=1 // pred_region
      _
    $region25: #{embedding_network_forward.1} parent=1 // pred_fallthru
      _
    // Predicated region
    $region26: #{embedding_network_forward.1} parent=1 // pred_check
      _
    $region27: #{embedding_network_forward.1} parent=1 // pred_check_branch
      %26 = sbr.rel (0) target = $region29
    $region28: #{embedding_network_forward.1} parent=1 // pred_region
      _
    $region29: #{embedding_network_forward.1} parent=1 // pred_fallthru
      _
    %v28 = vld [vmem:[%s0] sm:$0xff]
    %v29 = vpack.c.bf16 %v28, %v28
    %v30 = vld [vmem:[%s1] sm:$0xf]
    %v31 = vld [vmem:[%s1 + $0x4] sm:$0xf]
    %v32 = vld [vmem:[%s1 + $0x8] sm:$0xf]
    %v33 = vld [vmem:[%s1 + $0xc] sm:$0xf]
    %v34 = vld [vmem:[%s2] sm:$0x1]
    %v36 = vlaneseq
    %v37 = vshrl.u32 %v36, 7
    %v38 = vsub.s32 0, %v37
    %v39 = vrot.slane %v34, %v38
    %v45 = vunpack.c.l.b16 %v30
    %v46 = vunpack.c.l.b16 %v31
    %v47 = vunpack.c.l.b16 %v32
    %v48 = vunpack.c.l.b16 %v33
    %v49 = vpack.c.b16 %v46, %v45
    %v50 = vpack.c.b16 %v48, %v47
    %vm51 = vcmask 130048
    %v53 = vsel %vm51, %v29, 0
    %v56 = vsel %vm51, %v49, 0
    %v59 = vsel %vm51, %v50, 0
    %61 = vmatprep.subr.bf16.mxu0 0
    %62 = vmatpush1.bf16.xpose.msra.mxu0 %v56
    %63 = vmatprep.subr.bf16.mxu0 0
    %64 = vmatpush1.bf16.xpose.msra.mxu0 %v59
    %65 = vmatprep.subr.bf16.mxu0 0
    %66 = vmatpush1.bf16.xpose.msra.mxu0 0
    %67 = vmatprep.subr.bf16.mxu0 0
    %68 = vmatpush1.bf16.xpose.msra.mxu0 0
    %69 = vmatprep.subr.bf16.mxu0 0
    %70 = vmatpush1.bf16.xpose.msra.mxu0 0
    %71 = vmatprep.subr.bf16.mxu0 0
    %72 = vmatpush1.bf16.xpose.msra.mxu0 0
    %73 = vmatprep.subr.bf16.mxu0 0
    %74 = vmatpush1.bf16.xpose.msra.mxu0 0
    %75 = vmatprep.subr.bf16.mxu0 0
    %76 = vmatpush1.bf16.xpose.msra.mxu0 0
    %77 = vmatprep.subr.bf16.mxu0 0
    %78 = vmatpush1.bf16.xpose.msra.mxu0 0
    %79 = vmatprep.subr.bf16.mxu0 0
    %80 = vmatpush1.bf16.xpose.msra.mxu0 0
    %81 = vmatprep.subr.bf16.mxu0 0
    %82 = vmatpush1.bf16.xpose.msra.mxu0 0
    %83 = vmatprep.subr.bf16.mxu0 0
    %84 = vmatpush1.bf16.xpose.msra.mxu0 0
    %85 = vmatprep.subr.bf16.mxu0 0
    %86 = vmatpush1.bf16.xpose.msra.mxu0 0
    %87 = vmatprep.subr.bf16.mxu0 0
    %88 = vmatpush1.bf16.xpose.msra.mxu0 0
    %89 = vmatprep.subr.bf16.mxu0 0
    %90 = vmatpush1.bf16.xpose.msra.mxu0 0
    %91 = vmatprep.subr.bf16.mxu0 0
    %92 = vmatpush1.bf16.xpose.msra.mxu0 0
    %93 = vmatprep.mubr.bf16.mxu0 0
    %94 = vmatmul.mubr.bf16.gmra.mrb[0].mxu0 %v53
    %v95 = vpop.f32.mrb[0].mxu0
    %v96 = vadd.f32 %v39, %v95
    %v97 = vpop.f32.mrb[0].mxu0
    %v98 = vpop.f32.mrb[0].mxu0
    %v99 = vpop.f32.mrb[0].mxu0
    %100 = vdwg.mxu0
    %v101 = vtanh.pop %v96
    %v102 = vpack.c.bf16 %v101, %v101
    %v103 = vld [vmem:[%s3] sm:$0xf]
    %v104 = vld [vmem:[%s3 + $0x4] sm:$0xf]
    %v105 = vld [vmem:[%s3 + $0x8] sm:$0xf]
    %v106 = vld [vmem:[%s3 + $0xc] sm:$0xf]
    %v107 = vld [vmem:[%s4] sm:$0x1]
    %v109 = vlaneseq
    %v110 = vshrl.u32 %v109, 7
    %v111 = vsub.s32 0, %v110
    %v112 = vrot.slane %v107, %v111
    %v118 = vunpack.c.l.b16 %v103
    %v119 = vunpack.c.l.b16 %v104
    %v120 = vunpack.c.l.b16 %v105
    %v121 = vunpack.c.l.b16 %v106
    %v122 = vpack.c.b16 %v119, %v118
    %v123 = vpack.c.b16 %v121, %v120
    %vm124 = vcmask 261120
    %v126 = vsel %vm124, %v102, 0
    %v129 = vsel %vm124, %v122, 0
    %v132 = vsel %vm124, %v123, 0
    %134 = vmatprep.subr.bf16.mxu0 0
    %135 = vmatpush1.bf16.xpose.msra.mxu0 %v129
    %136 = vmatprep.subr.bf16.mxu0 0
    %137 = vmatpush1.bf16.xpose.msra.mxu0 %v132
    %138 = vmatprep.subr.bf16.mxu0 0
    %139 = vmatpush1.bf16.xpose.msra.mxu0 0
    %140 = vmatprep.subr.bf16.mxu0 0
    %141 = vmatpush1.bf16.xpose.msra.mxu0 0
    %142 = vmatprep.subr.bf16.mxu0 0
    %143 = vmatpush1.bf16.xpose.msra.mxu0 0
    %144 = vmatprep.subr.bf16.mxu0 0
    %145 = vmatpush1.bf16.xpose.msra.mxu0 0
    %146 = vmatprep.subr.bf16.mxu0 0
    %147 = vmatpush1.bf16.xpose.msra.mxu0 0
    %148 = vmatprep.subr.bf16.mxu0 0
    %149 = vmatpush1.bf16.xpose.msra.mxu0 0
    %150 = vmatprep.subr.bf16.mxu0 0
    %151 = vmatpush1.bf16.xpose.msra.mxu0 0
    %152 = vmatprep.subr.bf16.mxu0 0
    %153 = vmatpush1.bf16.xpose.msra.mxu0 0
    %154 = vmatprep.subr.bf16.mxu0 0
    %155 = vmatpush1.bf16.xpose.msra.mxu0 0
    %156 = vmatprep.subr.bf16.mxu0 0
    %157 = vmatpush1.bf16.xpose.msra.mxu0 0
    %158 = vmatprep.subr.bf16.mxu0 0
    %159 = vmatpush1.bf16.xpose.msra.mxu0 0
    %160 = vmatprep.subr.bf16.mxu0 0
    %161 = vmatpush1.bf16.xpose.msra.mxu0 0
    %162 = vmatprep.subr.bf16.mxu0 0
    %163 = vmatpush1.bf16.xpose.msra.mxu0 0
    %164 = vmatprep.subr.bf16.mxu0 0
    %165 = vmatpush1.bf16.xpose.msra.mxu0 0
    %166 = vmatprep.mubr.bf16.mxu0 0
    %167 = vmatmul.mubr.bf16.gmra.mrb[0].mxu0 %v126
    %v168 = vpop.f32.mrb[0].mxu0
    %v169 = vadd.f32 %v112, %v168
    %v170 = vpop.f32.mrb[0].mxu0
    %v171 = vpop.f32.mrb[0].mxu0
    %v172 = vpop.f32.mrb[0].mxu0
    %173 = vdwg.mxu0
    %v174 = vtanh.pop %v169
    %v175 = vpack.c.bf16 %v174, %v174
    %v176 = vld [vmem:[%s5] sm:$0xf]
    %v177 = vld [vmem:[%s5 + $0x4] sm:$0xf]
    %v178 = vld [vmem:[%s6] sm:$0x1]
    %v180 = vlaneseq
    %v181 = vshrl.u32 %v180, 7
    %v182 = vsub.s32 0, %v181
    %v183 = vrot.slane %v178, %v182
    %v187 = vunpack.c.l.b16 %v176
    %v188 = vunpack.c.l.b16 %v177
    %v189 = vpack.c.b16 %v188, %v187
    %v191 = vsel %vm124, %v175, 0
    %v194 = vsel %vm124, %v189, 0
    %196 = vmatprep.subr.bf16.mxu0 0
    %197 = vmatpush1.bf16.xpose.msra.mxu0 %v194
    %198 = vmatprep.subr.bf16.mxu0 0
    %199 = vmatpush1.bf16.xpose.msra.mxu0 0
    %200 = vmatprep.subr.bf16.mxu0 0
    %201 = vmatpush1.bf16.xpose.msra.mxu0 0
    %202 = vmatprep.subr.bf16.mxu0 0
    %203 = vmatpush1.bf16.xpose.msra.mxu0 0
    %204 = vmatprep.subr.bf16.mxu0 0
    %205 = vmatpush1.bf16.xpose.msra.mxu0 0
    %206 = vmatprep.subr.bf16.mxu0 0
    %207 = vmatpush1.bf16.xpose.msra.mxu0 0
    %208 = vmatprep.subr.bf16.mxu0 0
    %209 = vmatpush1.bf16.xpose.msra.mxu0 0
    %210 = vmatprep.subr.bf16.mxu0 0
    %211 = vmatpush1.bf16.xpose.msra.mxu0 0
    %212 = vmatprep.subr.bf16.mxu0 0
    %213 = vmatpush1.bf16.xpose.msra.mxu0 0
    %214 = vmatprep.subr.bf16.mxu0 0
    %215 = vmatpush1.bf16.xpose.msra.mxu0 0
    %216 = vmatprep.subr.bf16.mxu0 0
    %217 = vmatpush1.bf16.xpose.msra.mxu0 0
    %218 = vmatprep.subr.bf16.mxu0 0
    %219 = vmatpush1.bf16.xpose.msra.mxu0 0
    %220 = vmatprep.subr.bf16.mxu0 0
    %221 = vmatpush1.bf16.xpose.msra.mxu0 0
    %222 = vmatprep.subr.bf16.mxu0 0
    %223 = vmatpush1.bf16.xpose.msra.mxu0 0
    %224 = vmatprep.subr.bf16.mxu0 0
    %225 = vmatpush1.bf16.xpose.msra.mxu0 0
    %226 = vmatprep.subr.bf16.mxu0 0
    %227 = vmatpush1.bf16.xpose.msra.mxu0 0
    %228 = vmatprep.mubr.bf16.mxu0 0
    %229 = vmatmul.mubr.bf16.gmra.mrb[0].mxu0 %v191
    %v230 = vpop.f32.mrb[0].mxu0
    %v231 = vadd.f32 %v183, %v230
    %v232 = vpop.f32.mrb[0].mxu0
    %v233 = vpop.f32.mrb[0].mxu0
    %v234 = vpop.f32.mrb[0].mxu0
    %235 = vdwg.mxu0
    %236 = vst.msk [vmem:[#allocation2] sm:$0xff] %vm51, %v231
    // Predicated region
    $region30: #{embedding_network_forward.1} parent=1 // pred_check
      _
    $region31: #{embedding_network_forward.1} parent=1 // pred_check_branch
      %238 = sbr.rel (0) target = $region33
    $region32: #{embedding_network_forward.1} parent=1 // pred_region
      %s240 = ssub.s32 128, 128
      %241 = vsyncadd [#allocation3], %s240
      %s243 = sshll.u32 [#allocation2], 4
      %s244 = int_to_ptr.vmem [resolvable:$true] %s243
      %246 = dma.vmem_to_hbm [thread:$0]  %s244, 128, %s7, [#allocation3]
    $region33: #{embedding_network_forward.1} parent=1 // pred_fallthru
      _
    // Predicated region
    $region34: #{embedding_network_forward.1} parent=1 // pred_check
      _
    $region35: #{embedding_network_forward.1} parent=1 // pred_check_branch
      %248 = sbr.rel (0) target = $region37
    $region36: #{embedding_network_forward.1} parent=1 // pred_region
      %249 = dma.done [#allocation3], 128
    $region37: #{embedding_network_forward.1} parent=1 // pred_fallthru
      _
    %250 = vsyncpa [#allocation3], 1

</llo_original>
